<compile_context>
chip_gen: v7x
topology: tpu7x:2x2x1
jax: 0.10.0
libtpu: 0.0.40
codegen_flags: <defaults>
</compile_context>

<pallas_src>
import jax
import jax.numpy as jnp
from jax.experimental import pallas as pl
from jax.experimental.pallas import tpu as pltpu

FOLD = 4  # batch rows folded into the lane dimension (keep N = FOLD*2D <= 128 on v5e)


# ----------------------------- kernel ---------------------------------------
def compact_layer_kernel(x_ref, w1_ref, w2_ref, wa1_ref, wa2_ref, b_ref, out_ref):
    """One folded batch tile of the fused CompactLayer forward.

    x_ref   : (TB, FOLD*2*input_dim)  bf16, 4 batch rows per folded row
    w1_ref  : (FOLD*2*input_dim, FOLD*2D) bf16, blockdiag_4(row-permuted blockdiag(w11,w21))
    w2_ref  : (FOLD*2D, FOLD*2D)      bf16, blockdiag_4(col-permuted blockdiag(w12,w22))
    wa1_ref : (FOLD*2D, FOLD*2D)      bf16, blockdiag_4(attention dense1, rows permuted)
    wa2_ref : (FOLD*2D, FOLD*2D)      bf16, blockdiag_4(attention dense2, cols permuted)
    b_ref   : (4, FOLD*2D)            f32, rows = [b1 | b2 | ba1 | ba2], tiled 4x
    out_ref : (TB, FOLD*2D)           f32, channel-interleaved gated features
    """
    ball = b_ref[...]                          # (4, F*C) -- single small load
    b1, b2 = ball[0:1, :], ball[1:2, :]
    ba1, ba2 = ball[2:3, :], ball[3:4, :]

    # Block1/Block2 fused (block-diagonal weights): bf16 MXU, f32 accumulation.
    h = jnp.maximum(
        jnp.dot(x_ref[...], w1_ref[...], preferred_element_type=jnp.float32) + b1,
        0.0)
    z = jnp.maximum(
        jnp.dot(h.astype(jnp.bfloat16), w2_ref[...],
                preferred_element_type=jnp.float32) + b2,
        0.0)

    # Attention (squeeze-excite gate over the 2D features of each batch row).
    a = jnp.maximum(
        jnp.dot(z.astype(jnp.bfloat16), wa1_ref[...],
                preferred_element_type=jnp.float32) + ba1,
        0.0)
    g = jax.nn.sigmoid(
        jnp.dot(a.astype(jnp.bfloat16), wa2_ref[...],
                preferred_element_type=jnp.float32) + ba2)

    # out = B * gate + B  (residual skip), f32, lane-dense store.
    out_ref[...] = (z * g + z).astype(out_ref.dtype)


# ----------------------------- parameter plumbing ----------------------------
def init_params(input_dim, D, key):
    """Raw parameters, shapes matching the nn.Module __init__.

    PyTorch Linear weights are (out, in); stored pre-transposed (in, out).
    Biases kept 2-D (1, out).
    """
    ks = jax.random.split(key, 12)
    C = 2 * D
    sc = 0.1

    def w(k, i, o):
        return (sc * jax.random.normal(k, (i, o))).astype(jnp.float32)

    def b(k, o):
        return (sc * jax.random.normal(k, (1, o))).astype(jnp.float32)

    return dict(
        w11=w(ks[0], input_dim, D), b11=b(ks[1], D),
        w12=w(ks[2], D, D),         b12=b(ks[3], D),
        w21=w(ks[4], input_dim, D), b21=b(ks[5], D),
        w22=w(ks[6], D, D),         b22=b(ks[7], D),
        wa1=w(ks[8], C, C),         ba1=b(ks[9], C),
        wa2=w(ks[10], C, C),        ba2=b(ks[11], C),
    )


def _blockdiag_rep(w, f):
    """blockdiag(w, w, ..., w) with f copies (init-time only)."""
    r, c = w.shape
    out = jnp.zeros((f * r, f * c), w.dtype)
    for j in range(f):
        out = out.at[j * r:(j + 1) * r, j * c:(j + 1) * c].set(w)
    return out


def fuse_params(p, input_dim, D, fold=FOLD):
    """One-time init-side fusion + permutation + 4x batch fold.

    - W1 = blockdiag(w11, w21), rows permuted so x = y.reshape(B, 2*input_dim)
      (interleaved [s0_0, s1_0, s0_1, ...]) is consumed directly.
    - W2 = blockdiag(w12, w22), columns permuted so z comes out channel-
      interleaved (d0_ch0, d0_ch1, d1_ch0, ...)  -> final (B, D, 2) is a reshape.
    - wa1 rows / wa2 columns (and ba2) permuted consistently with z's layout.
    - Every fused weight is then replicated block-diagonally `fold` times so the
      kernel processes `fold` batch rows per lane-dense 128-wide row; biases are
      tiled `fold`x along columns and packed into one (4, fold*2D) f32 slab.
    - Weights cast to bf16 (MXU-native); biases stay f32.
    """
    C = 2 * D

    # fc1: block-diagonal, then row-permute to the interleaved-input layout.
    w1 = jnp.zeros((2 * input_dim, C), jnp.float32)
    w1 = w1.at[:input_dim, :D].set(p["w11"]).at[input_dim:, D:].set(p["w21"])
    r = jnp.arange(2 * input_dim)
    row_perm = (r % 2) * input_dim + (r // 2)        # row 2*i+c <- c*input_dim + i
    w1 = w1[row_perm, :]
    b1 = jnp.concatenate([p["b11"], p["b21"]], axis=-1)          # (1, 2D)

    # fc2: block-diagonal, then column-permute to the interleaved-output layout.
    w2 = jnp.zeros((C, C), jnp.float32)
    w2 = w2.at[:D, :D].set(p["w12"]).at[D:, D:].set(p["w22"])
    b2 = jnp.concatenate([p["b12"], p["b22"]], axis=-1)          # (1, 2D)
    k = jnp.arange(C)
    col_perm = (k % 2) * D + (k // 2)                # col 2*d+c <- c*D + d
    w2 = w2[:, col_perm]
    b2 = b2[:, col_perm]

    # Attention weights permuted to consume / produce permuted z columns.
    wa1 = p["wa1"][col_perm, :]
    ba1 = p["ba1"]
    wa2 = p["wa2"][:, col_perm]
    ba2 = p["ba2"][:, col_perm]

    biases = jnp.concatenate([b1, b2, ba1, ba2], axis=0)         # (4, 2D) f32
    biases = jnp.tile(biases, (1, fold))                         # (4, fold*2D)

    return dict(
        w1=_blockdiag_rep(w1, fold).astype(jnp.bfloat16),    # (fold*2*in, fold*2D)
        w2=_blockdiag_rep(w2, fold).astype(jnp.bfloat16),    # (fold*2D, fold*2D)
        wa1=_blockdiag_rep(wa1, fold).astype(jnp.bfloat16),
        wa2=_blockdiag_rep(wa2, fold).astype(jnp.bfloat16),
        biases=biases,
    )


# ----------------------------- wrapper ---------------------------------------
@jax.jit
def compact_layer(y, fused):
    """y: (batch, input_dim, 2) -> (batch, D, 2)."""
    batch, input_dim, _ = y.shape
    FK = fused["w1"].shape[0]               # fold * 2 * input_dim
    FC = fused["w1"].shape[1]               # fold * 2D
    fold = FK // (2 * input_dim)
    C = FC // fold
    D = C // 2

    # Free reshape; columns are [s0_0, s1_0, s0_1, s1_1, ...] per batch row.
    x = y.reshape(batch, 2 * input_dim)

    # Pad so the folded row count is a multiple of 8 (clean sublane tiles, no
    # masked stores).  No-op (zero bytes moved) when batch % (fold*8) == 0.
    pad = (-batch) % (fold * 8)
    if pad:
        x = jnp.pad(x, ((0, pad), (0, 0)))
    pb = batch + pad
    fb = pb // fold                          # folded rows, multiple of 8

    # 4 batch rows per folded row -> lane-dense 128-wide loads/matmuls/stores.
    xf = x.reshape(fb, FK).astype(jnp.bfloat16)

    # Batch tile (in folded rows).  Up to 1024 folded rows (= 4096 batch rows):
    # per-step DMA/compute dwarfs the ~0.35us grid-step overhead, VMEM stays
    # ~1.5 MiB << the 32 MiB default scoped limit on every generation (incl.
    # v7x's 64 MiB physical VMEM).  When everything fits one tile, split into
    # >=2 programs so the "parallel" axis can shard across v7x's 2 TensorCores.
    TB = min(fb, 1024)
    if TB == fb and fb >= 16:
        TB = ((fb // 2 + 7) // 8) * 8
    grid = (pl.cdiv(fb, TB),)

    const = lambda i: (0, 0)                 # weights/biases: VMEM-resident
    out_f = pl.pallas_call(
        compact_layer_kernel,
        out_shape=jax.ShapeDtypeStruct((fb, FC), jnp.float32),
        grid=grid,
        in_specs=[
            pl.BlockSpec((TB, FK), lambda i: (i, 0)),   # x (folded)
            pl.BlockSpec((FK, FC), const),              # w1
            pl.BlockSpec((FC, FC), const),              # w2
            pl.BlockSpec((FC, FC), const),              # wa1
            pl.BlockSpec((FC, FC), const),              # wa2
            pl.BlockSpec((4, FC), const),               # bias slab
        ],
        out_specs=pl.BlockSpec((TB, FC), lambda i: (i, 0)),
        compiler_params=pltpu.CompilerParams(
            dimension_semantics=("parallel",)),
    )(xf, fused["w1"], fused["w2"], fused["wa1"], fused["wa2"], fused["biases"])

    # Unfold (free reshape: column block j of folded row i == batch row fold*i+j),
    # drop pad rows, then the interleaved columns make (B, D, 2) a free reshape.
    out = out_f.reshape(pb, C)
    if pad:
        out = out[:batch]
    return out.reshape(batch, D, 2)


# ----------------------------- pure-JAX reference ----------------------------
def compact_layer_ref(y, params, D):
    s0, s1 = y[:, :, 0], y[:, :, 1]
    z1 = jax.nn.relu(jax.nn.relu(s0 @ params["w11"] + params["b11"])
                     @ params["w12"] + params["b12"])
    z2 = jax.nn.relu(jax.nn.relu(s1 @ params["w21"] + params["b21"])
                     @ params["w22"] + params["b22"])
    z = jnp.concatenate([z1, z2], axis=-1)
    a = jax.nn.relu(z @ params["wa1"] + params["ba1"])
    g = jax.nn.sigmoid(a @ params["wa2"] + params["ba2"])
    out = z * g + z
    return jnp.stack([out[:, :D], out[:, D:]], axis=-1)


# ----------------------------- main ------------------------------------------
if __name__ == "__main__":
    batch, input_dim, D = 8, 32, 16

    key = jax.random.PRNGKey(0)
    k_y, k_p = jax.random.split(key)
    y = jax.random.normal(k_y, (batch, input_dim, 2), dtype=jnp.float32)
    params = init_params(input_dim, D, k_p)
    fused = fuse_params(params, input_dim, D, fold=FOLD)

    out = compact_layer(y, fused)
    out = jax.block_until_ready(out)

    ref = compact_layer_ref(y, params, D)
    assert out.shape == (batch, D, 2), out.shape
    # bf16 weights/activations vs f32 reference: expected max |err| ~ 5e-3 at
    # these scales; 2e-2 leaves margin while still catching any layout bug.
    max_err = float(jnp.max(jnp.abs(out - ref)))
    assert jnp.allclose(out, ref, atol=2e-2, rtol=2e-2), max_err

    print("KERNEL_OK")
</pallas_src>

<mosaic_0001>
module attributes {stable_mosaic.version = 11 : i64} {
  func.func @compact_layer_kernel(%arg0: i32, %arg1: memref<8x256xbf16, #tpu.memory_space<vmem>>, %arg2: memref<256x128xbf16, #tpu.memory_space<vmem>>, %arg3: memref<128x128xbf16, #tpu.memory_space<vmem>>, %arg4: memref<128x128xbf16, #tpu.memory_space<vmem>>, %arg5: memref<128x128xbf16, #tpu.memory_space<vmem>>, %arg6: memref<4x128xf32, #tpu.memory_space<vmem>>, %arg7: memref<8x128xf32, #tpu.memory_space<vmem>>) attributes {dimension_semantics = [#tpu.dimension_semantics<parallel>], iteration_bounds = array<i64: 1>, scalar_prefetch = 0 : i64, scratch_operands = 0 : i64, tpu.core_type = #tpu.core_type<tc>, window_params = [{transform_indices = @transform_0, window_bounds = array<i64: 8, 256>}, {pipeline_mode = #tpu.pipeline_mode<synchronous>, transform_indices = @transform_1, window_bounds = array<i64: 256, 128>}, {pipeline_mode = #tpu.pipeline_mode<synchronous>, transform_indices = @transform_2, window_bounds = array<i64: 128, 128>}, {pipeline_mode = #tpu.pipeline_mode<synchronous>, transform_indices = @transform_3, window_bounds = array<i64: 128, 128>}, {pipeline_mode = #tpu.pipeline_mode<synchronous>, transform_indices = @transform_4, window_bounds = array<i64: 128, 128>}, {pipeline_mode = #tpu.pipeline_mode<synchronous>, transform_indices = @transform_5, window_bounds = array<i64: 4, 128>}, {transform_indices = @transform_6, window_bounds = array<i64: 8, 128>}]} {
    %c0 = arith.constant 0 : index
    %c0_0 = arith.constant 0 : index
    %0 = vector.load %arg6[%c0, %c0_0] : memref<4x128xf32, #tpu.memory_space<vmem>>, vector<4x128xf32>
    %1 = vector.extract_strided_slice %0 {offsets = [0, 0], sizes = [1, 128], strides = [1, 1]} : vector<4x128xf32> to vector<1x128xf32>
    %2 = vector.extract_strided_slice %0 {offsets = [1, 0], sizes = [1, 128], strides = [1, 1]} : vector<4x128xf32> to vector<1x128xf32>
    %3 = vector.extract_strided_slice %0 {offsets = [2, 0], sizes = [1, 128], strides = [1, 1]} : vector<4x128xf32> to vector<1x128xf32>
    %4 = vector.extract_strided_slice %0 {offsets = [3, 0], sizes = [1, 128], strides = [1, 1]} : vector<4x128xf32> to vector<1x128xf32>
    %c0_1 = arith.constant 0 : index
    %c0_2 = arith.constant 0 : index
    %5 = vector.load %arg1[%c0_1, %c0_2] : memref<8x256xbf16, #tpu.memory_space<vmem>>, vector<8x256xbf16>
    %c0_3 = arith.constant 0 : index
    %c0_4 = arith.constant 0 : index
    %6 = vector.load %arg2[%c0_3, %c0_4] : memref<256x128xbf16, #tpu.memory_space<vmem>>, vector<256x128xbf16>
    %cst = arith.constant dense<0.000000e+00> : vector<8x128xf32>
    %7 = tpu.matmul %5, %6, %cst {dimension_numbers = #tpu.dot_dimension_numbers<[1], [0], [0], [1], [0, 0, 1, 1], [], []>} : vector<8x256xbf16>, vector<256x128xbf16>, vector<8x128xf32> -> vector<8x128xf32>
    %8 = vector.broadcast %1 : vector<1x128xf32> to vector<8x128xf32>
    %9 = arith.addf %7, %8 : vector<8x128xf32>
    %cst_5 = arith.constant 0.000000e+00 : f32
    %10 = vector.broadcast %cst_5 : f32 to vector<8x128xf32>
    %11 = arith.maximumf %9, %10 : vector<8x128xf32>
    %12 = arith.truncf %11 : vector<8x128xf32> to vector<8x128xbf16>
    %c0_6 = arith.constant 0 : index
    %c0_7 = arith.constant 0 : index
    %13 = vector.load %arg3[%c0_6, %c0_7] : memref<128x128xbf16, #tpu.memory_space<vmem>>, vector<128x128xbf16>
    %cst_8 = arith.constant dense<0.000000e+00> : vector<8x128xf32>
    %14 = tpu.matmul %12, %13, %cst_8 {dimension_numbers = #tpu.dot_dimension_numbers<[1], [0], [0], [1], [0, 0, 1, 1], [], []>} : vector<8x128xbf16>, vector<128x128xbf16>, vector<8x128xf32> -> vector<8x128xf32>
    %15 = vector.broadcast %2 : vector<1x128xf32> to vector<8x128xf32>
    %16 = arith.addf %14, %15 : vector<8x128xf32>
    %cst_9 = arith.constant 0.000000e+00 : f32
    %17 = vector.broadcast %cst_9 : f32 to vector<8x128xf32>
    %18 = arith.maximumf %16, %17 : vector<8x128xf32>
    %19 = arith.truncf %18 : vector<8x128xf32> to vector<8x128xbf16>
    %c0_10 = arith.constant 0 : index
    %c0_11 = arith.constant 0 : index
    %20 = vector.load %arg4[%c0_10, %c0_11] : memref<128x128xbf16, #tpu.memory_space<vmem>>, vector<128x128xbf16>
    %cst_12 = arith.constant dense<0.000000e+00> : vector<8x128xf32>
    %21 = tpu.matmul %19, %20, %cst_12 {dimension_numbers = #tpu.dot_dimension_numbers<[1], [0], [0], [1], [0, 0, 1, 1], [], []>} : vector<8x128xbf16>, vector<128x128xbf16>, vector<8x128xf32> -> vector<8x128xf32>
    %22 = vector.broadcast %3 : vector<1x128xf32> to vector<8x128xf32>
    %23 = arith.addf %21, %22 : vector<8x128xf32>
    %cst_13 = arith.constant 0.000000e+00 : f32
    %24 = vector.broadcast %cst_13 : f32 to vector<8x128xf32>
    %25 = arith.maximumf %23, %24 : vector<8x128xf32>
    %26 = arith.truncf %25 : vector<8x128xf32> to vector<8x128xbf16>
    %c0_14 = arith.constant 0 : index
    %c0_15 = arith.constant 0 : index
    %27 = vector.load %arg5[%c0_14, %c0_15] : memref<128x128xbf16, #tpu.memory_space<vmem>>, vector<128x128xbf16>
    %cst_16 = arith.constant dense<0.000000e+00> : vector<8x128xf32>
    %28 = tpu.matmul %26, %27, %cst_16 {dimension_numbers = #tpu.dot_dimension_numbers<[1], [0], [0], [1], [0, 0, 1, 1], [], []>} : vector<8x128xbf16>, vector<128x128xbf16>, vector<8x128xf32> -> vector<8x128xf32>
    %29 = vector.broadcast %4 : vector<1x128xf32> to vector<8x128xf32>
    %30 = arith.addf %28, %29 : vector<8x128xf32>
    %31 = arith.negf %30 : vector<8x128xf32>
    %32 = math.exp %31 : vector<8x128xf32>
    %cst_17 = arith.constant 1.000000e+00 : f32
    %33 = vector.broadcast %cst_17 : f32 to vector<8x128xf32>
    %34 = arith.addf %33, %32 : vector<8x128xf32>
    %35 = arith.divf %33, %34 : vector<8x128xf32>
    %36 = arith.mulf %18, %35 : vector<8x128xf32>
    %37 = arith.addf %36, %18 : vector<8x128xf32>
    %c0_18 = arith.constant 0 : index
    %c0_19 = arith.constant 0 : index
    %38 = vector.load %arg7[%c0_18, %c0_19] : memref<8x128xf32, #tpu.memory_space<vmem>>, vector<8x128xf32>
    tpu.vector_store %arg7[%c0_18, %c0_19], %37 {strides = array<i32>} : memref<8x128xf32, #tpu.memory_space<vmem>>, vector<8x128xf32>,
    return
  }
  func.func @transform_0(%arg0: i32) -> (i32, i32) {
    %c0_i32 = arith.constant 0 : i32
    %c0_i32_0 = arith.constant 0 : i32
    return %arg0, %c0_i32 : i32, i32
  }
  func.func @transform_1(%arg0: i32) -> (i32, i32) {
    %c0_i32 = arith.constant 0 : i32
    %c0_i32_0 = arith.constant 0 : i32
    %c0_i32_1 = arith.constant 0 : i32
    return %c0_i32, %c0_i32_0 : i32, i32
  }
  func.func @transform_2(%arg0: i32) -> (i32, i32) {
    %c0_i32 = arith.constant 0 : i32
    %c0_i32_0 = arith.constant 0 : i32
    %c0_i32_1 = arith.constant 0 : i32
    return %c0_i32, %c0_i32_0 : i32, i32
  }
  func.func @transform_3(%arg0: i32) -> (i32, i32) {
    %c0_i32 = arith.constant 0 : i32
    %c0_i32_0 = arith.constant 0 : i32
    %c0_i32_1 = arith.constant 0 : i32
    return %c0_i32, %c0_i32_0 : i32, i32
  }
  func.func @transform_4(%arg0: i32) -> (i32, i32) {
    %c0_i32 = arith.constant 0 : i32
    %c0_i32_0 = arith.constant 0 : i32
    %c0_i32_1 = arith.constant 0 : i32
    return %c0_i32, %c0_i32_0 : i32, i32
  }
  func.func @transform_5(%arg0: i32) -> (i32, i32) {
    %c0_i32 = arith.constant 0 : i32
    %c0_i32_0 = arith.constant 0 : i32
    %c0_i32_1 = arith.constant 0 : i32
    return %c0_i32, %c0_i32_0 : i32, i32
  }
  func.func @transform_6(%arg0: i32) -> (i32, i32) {
    %c0_i32 = arith.constant 0 : i32
    %c0_i32_0 = arith.constant 0 : i32
    return %arg0, %c0_i32 : i32, i32
  }
}

</mosaic_0001>

<llo_original>
// kernel: compact_layer.1
$region0: #{compact_layer.1}
  #allocation0 [shape = 'u32[]', space=smem, size = 0x4, offset = 0x4, fixed_abs, tag = 'smem constant byte address 0x4 - core index']
  #allocation1 [shape = 'u32[144,128]{1,0:T(1,128)}', space=vmem, size = 0x12000, scoped, tag = 'internal scratch']
  %s0 = inlined_call_operand.vmem [shape: bf16[8,256], index: 0, kind: input, shape index: {}]
  %s1 = inlined_call_operand.vmem [shape: bf16[256,128], index: 1, kind: input, shape index: {}]
  %s2 = inlined_call_operand.hbm [shape: bf16[128,128], index: 2, kind: input, shape index: {}]
  %s3 = inlined_call_operand.hbm [shape: bf16[128,128], index: 3, kind: input, shape index: {}]
  %s4 = inlined_call_operand.hbm [shape: bf16[128,128], index: 4, kind: input, shape index: {}]
  %s5 = inlined_call_operand.vmem [shape: f32[4,128], index: 5, kind: input, shape index: {}]
  %s6 = inlined_call_operand.vmem [shape: f32[8,128], index: 6, kind: output, shape index: {}]
  %s7 = sld [smem:[#allocation0]]
  $region46: #{compact_layer.1} parent=0
    _
  %s9 = ssub.s32 1, %s7
  %s10 = scalar_select 0, %s9, %s7
  $region1: #{compact_layer.1} parent=0
    #allocation2 [shape = 'u8[32768]{0}', space=vmem, size = 0x8000, scoped, tag = 'input window, operand 2, single buffered']
    #allocation3 [shape = 's32[1]{0}', space=sflag, size = 0x4, scoped, tag = 'scoped memory for compact_layer.1']
    #allocation4 [shape = 'u8[32768]{0}', space=vmem, size = 0x8000, scoped, tag = 'input window, operand 3, single buffered']
    #allocation5 [shape = 's32[1]{0}', space=sflag, size = 0x4, scoped, tag = 'scoped memory for compact_layer.1']
    #allocation6 [shape = 'u8[32768]{0}', space=vmem, size = 0x8000, scoped, tag = 'input window, operand 4, single buffered']
    %11 = vsyncpa [#allocation3], 0
    %12 = vsyncpa [#allocation5], 0
    // Predicated region
    $region2: #{compact_layer.1} parent=1 // pred_check
      _
    $region3: #{compact_layer.1} parent=1 // pred_check_branch
      %14 = sbr.rel (0) target = $region5
    $region4: #{compact_layer.1} parent=1 // pred_region
      _
    $region5: #{compact_layer.1} parent=1 // pred_fallthru
      _
    // Predicated region
    $region6: #{compact_layer.1} parent=1 // pred_check
      _
    $region7: #{compact_layer.1} parent=1 // pred_check_branch
      %16 = sbr.rel (0) target = $region9
    $region8: #{compact_layer.1} parent=1 // pred_region
      _
    $region9: #{compact_layer.1} parent=1 // pred_fallthru
      _
    // Predicated region
    $region10: #{compact_layer.1} parent=1 // pred_check
      _
    $region11: #{compact_layer.1} parent=1 // pred_check_branch
      %18 = sbr.rel (0) target = $region13
    $region12: #{compact_layer.1} parent=1 // pred_region
      %s20 = ssub.s32 1024, 1024
      %21 = vsyncadd [#allocation3], %s20
      %s22 = sshll.u32 [#allocation2], 4
      %s23 = int_to_ptr.vmem [resolvable:$true] %s22
      %28 = dma.hbm_to_vmem [thread:$0]  %s2, 1024, %s23, [#allocation3], 64, 64, 4
    $region13: #{compact_layer.1} parent=1 // pred_fallthru
      _
    // Predicated region
    $region14: #{compact_layer.1} parent=1 // pred_check
      _
    $region15: #{compact_layer.1} parent=1 // pred_check_branch
      %30 = sbr.rel (0) target = $region17
    $region16: #{compact_layer.1} parent=1 // pred_region
      %s32 = ssub.s32 1024, 1024
      %33 = vsyncadd [#allocation5], %s32
      %s34 = sshll.u32 [#allocation4], 4
      %s35 = int_to_ptr.vmem [resolvable:$true] %s34
      %40 = dma.hbm_to_vmem [thread:$0]  %s3, 1024, %s35, [#allocation5], 64, 64, 4
    $region17: #{compact_layer.1} parent=1 // pred_fallthru
      _
    // Predicated region
    $region18: #{compact_layer.1} parent=1 // pred_check
      _
    $region19: #{compact_layer.1} parent=1 // pred_check_branch
      %42 = sbr.rel (0) target = $region21
    $region20: #{compact_layer.1} parent=1 // pred_region
      %s44 = ssub.s32 1024, 1024
      %45 = vsyncadd [#allocation5], %s44
      %s46 = sshll.u32 [#allocation6], 4
      %s47 = int_to_ptr.vmem [resolvable:$true] %s46
      %52 = dma.hbm_to_vmem [thread:$0]  %s4, 1024, %s47, [#allocation5], 64, 64, 4
    $region21: #{compact_layer.1} parent=1 // pred_fallthru
      _
    // Predicated region
    $region22: #{compact_layer.1} parent=1 // pred_check
      _
    $region23: #{compact_layer.1} parent=1 // pred_check_branch
      %54 = sbr.rel (0) target = $region25
    $region24: #{compact_layer.1} parent=1 // pred_region
      _
    $region25: #{compact_layer.1} parent=1 // pred_fallthru
      _
    // Predicated region
    $region26: #{compact_layer.1} parent=1 // pred_check
      _
    $region27: #{compact_layer.1} parent=1 // pred_check_branch
      %56 = sbr.rel (0) target = $region29
    $region28: #{compact_layer.1} parent=1 // pred_region
      %57 = dma.done [#allocation3], 1024
    $region29: #{compact_layer.1} parent=1 // pred_fallthru
      _
    // Predicated region
    $region30: #{compact_layer.1} parent=1 // pred_check
      _
    $region31: #{compact_layer.1} parent=1 // pred_check_branch
      %59 = sbr.rel (0) target = $region33
    $region32: #{compact_layer.1} parent=1 // pred_region
      %60 = dma.done [#allocation5], 1024
    $region33: #{compact_layer.1} parent=1 // pred_fallthru
      _
    // Predicated region
    $region34: #{compact_layer.1} parent=1 // pred_check
      _
    $region35: #{compact_layer.1} parent=1 // pred_check_branch
      %62 = sbr.rel (0) target = $region37
    $region36: #{compact_layer.1} parent=1 // pred_region
      %63 = dma.done [#allocation5], 1024
    $region37: #{compact_layer.1} parent=1 // pred_fallthru
      _
    %v65 = vld [vmem:[%s5] sm:$0xf]
    %v66 = vld [vmem:[%s0] sm:$0xff]
    %v67 = vld [vmem:[%s1] sm:$0xf]
    %v68 = vld [vmem:[%s1 + $0x4] sm:$0xf]
    %v69 = vld [vmem:[%s1 + $0x8] sm:$0xf]
    %v70 = vld [vmem:[%s1 + $0xc] sm:$0xf]
    %v71 = vld [vmem:[%s1 + $0x10] sm:$0xf]
    %v72 = vld [vmem:[%s1 + $0x14] sm:$0xf]
    %v73 = vld [vmem:[%s1 + $0x18] sm:$0xf]
    %v74 = vld [vmem:[%s1 + $0x1c] sm:$0xf]
    %v75 = vld [vmem:[%s1 + $0x20] sm:$0xf]
    %v76 = vld [vmem:[%s1 + $0x24] sm:$0xf]
    %v77 = vld [vmem:[%s1 + $0x28] sm:$0xf]
    %v78 = vld [vmem:[%s1 + $0x2c] sm:$0xf]
    %v79 = vld [vmem:[%s1 + $0x30] sm:$0xf]
    %v80 = vld [vmem:[%s1 + $0x34] sm:$0xf]
    %v81 = vld [vmem:[%s1 + $0x38] sm:$0xf]
    %v82 = vld [vmem:[%s1 + $0x3c] sm:$0xf]
    %v83 = vld [vmem:[%s1 + $0x40] sm:$0xf]
    %v84 = vld [vmem:[%s1 + $0x44] sm:$0xf]
    %v85 = vld [vmem:[%s1 + $0x48] sm:$0xf]
    %v86 = vld [vmem:[%s1 + $0x4c] sm:$0xf]
    %v87 = vld [vmem:[%s1 + $0x50] sm:$0xf]
    %v88 = vld [vmem:[%s1 + $0x54] sm:$0xf]
    %v89 = vld [vmem:[%s1 + $0x58] sm:$0xf]
    %v90 = vld [vmem:[%s1 + $0x5c] sm:$0xf]
    %v91 = vld [vmem:[%s1 + $0x60] sm:$0xf]
    %v92 = vld [vmem:[%s1 + $0x64] sm:$0xf]
    %v93 = vld [vmem:[%s1 + $0x68] sm:$0xf]
    %v94 = vld [vmem:[%s1 + $0x6c] sm:$0xf]
    %v95 = vld [vmem:[%s1 + $0x70] sm:$0xf]
    %v96 = vld [vmem:[%s1 + $0x74] sm:$0xf]
    %v97 = vld [vmem:[%s1 + $0x78] sm:$0xf]
    %v98 = vld [vmem:[%s1 + $0x7c] sm:$0xf]
    %v99 = vlaneseq
    %v100 = vshrl.u32 %v99, 7
    %v101 = vsub.s32 0, %v100
    %v102 = vrot.slane %v65, %v101
    %v104 = vunpack.c.l.b16 %v66
    %v105 = vunpack.c.h.b16 %v66
    %v106 = vpack.c.b16 %v104, %v104
    %v107 = vpack.c.b16 %v105, %v105
    %v142 = vunpack.c.l.b16 %v67
    %v143 = vunpack.c.l.b16 %v68
    %v144 = vunpack.c.l.b16 %v69
    %v145 = vunpack.c.l.b16 %v70
    %v146 = vunpack.c.l.b16 %v71
    %v147 = vunpack.c.l.b16 %v72
    %v148 = vunpack.c.l.b16 %v73
    %v149 = vunpack.c.l.b16 %v74
    %v150 = vunpack.c.l.b16 %v75
    %v151 = vunpack.c.l.b16 %v76
    %v152 = vunpack.c.l.b16 %v77
    %v153 = vunpack.c.l.b16 %v78
    %v154 = vunpack.c.l.b16 %v79
    %v155 = vunpack.c.l.b16 %v80
    %v156 = vunpack.c.l.b16 %v81
    %v157 = vunpack.c.l.b16 %v82
    %v158 = vunpack.c.l.b16 %v83
    %v159 = vunpack.c.l.b16 %v84
    %v160 = vunpack.c.l.b16 %v85
    %v161 = vunpack.c.l.b16 %v86
    %v162 = vunpack.c.l.b16 %v87
    %v163 = vunpack.c.l.b16 %v88
    %v164 = vunpack.c.l.b16 %v89
    %v165 = vunpack.c.l.b16 %v90
    %v166 = vunpack.c.l.b16 %v91
    %v167 = vunpack.c.l.b16 %v92
    %v168 = vunpack.c.l.b16 %v93
    %v169 = vunpack.c.l.b16 %v94
    %v170 = vunpack.c.l.b16 %v95
    %v171 = vunpack.c.l.b16 %v96
    %v172 = vunpack.c.l.b16 %v97
    %v173 = vunpack.c.l.b16 %v98
    %v174 = vpack.c.b16 %v143, %v142
    %v175 = vpack.c.b16 %v145, %v144
    %v176 = vpack.c.b16 %v147, %v146
    %v177 = vpack.c.b16 %v149, %v148
    %v178 = vpack.c.b16 %v151, %v150
    %v179 = vpack.c.b16 %v153, %v152
    %v180 = vpack.c.b16 %v155, %v154
    %v181 = vpack.c.b16 %v157, %v156
    %v182 = vpack.c.b16 %v159, %v158
    %v183 = vpack.c.b16 %v161, %v160
    %v184 = vpack.c.b16 %v163, %v162
    %v185 = vpack.c.b16 %v165, %v164
    %v186 = vpack.c.b16 %v167, %v166
    %v187 = vpack.c.b16 %v169, %v168
    %v188 = vpack.c.b16 %v171, %v170
    %v189 = vpack.c.b16 %v173, %v172
    %206 = vmatprep.subr.bf16.mxu0 0
    %207 = vmatpush1.bf16.msra.mxu0 %v174
    %208 = vmatprep.subr.bf16.mxu0 0
    %209 = vmatpush1.bf16.msra.mxu0 %v175
    %210 = vmatprep.subr.bf16.mxu0 0
    %211 = vmatpush1.bf16.msra.mxu0 %v176
    %212 = vmatprep.subr.bf16.mxu0 0
    %213 = vmatpush1.bf16.msra.mxu0 %v177
    %214 = vmatprep.subr.bf16.mxu0 0
    %215 = vmatpush1.bf16.msra.mxu0 %v178
    %216 = vmatprep.subr.bf16.mxu0 0
    %217 = vmatpush1.bf16.msra.mxu0 %v179
    %218 = vmatprep.subr.bf16.mxu0 0
    %219 = vmatpush1.bf16.msra.mxu0 %v180
    %220 = vmatprep.subr.bf16.mxu0 0
    %221 = vmatpush1.bf16.msra.mxu0 %v181
    %222 = vmatprep.subr.bf16.mxu0 0
    %223 = vmatpush1.bf16.msra.mxu0 %v182
    %224 = vmatprep.subr.bf16.mxu0 0
    %225 = vmatpush1.bf16.msra.mxu0 %v183
    %226 = vmatprep.subr.bf16.mxu0 0
    %227 = vmatpush1.bf16.msra.mxu0 %v184
    %228 = vmatprep.subr.bf16.mxu0 0
    %229 = vmatpush1.bf16.msra.mxu0 %v185
    %230 = vmatprep.subr.bf16.mxu0 0
    %231 = vmatpush1.bf16.msra.mxu0 %v186
    %232 = vmatprep.subr.bf16.mxu0 0
    %233 = vmatpush1.bf16.msra.mxu0 %v187
    %234 = vmatprep.subr.bf16.mxu0 0
    %235 = vmatpush1.bf16.msra.mxu0 %v188
    %236 = vmatprep.subr.bf16.mxu0 0
    %237 = vmatpush1.bf16.msra.mxu0 %v189
    %238 = vmatprep.mubr.bf16.mxu0 %v107
    %239 = vmatmul.mubr.bf16.gmra.mrb[0].mxu0 %v106
    %v240 = vpop.f32.mrb[0].mxu0
    %v241 = vadd.f32 %v102, %v240
    %v242 = vpop.f32.mrb[0].mxu0
    %v243 = vpop.f32.mrb[0].mxu0
    %v244 = vpop.f32.mrb[0].mxu0
    %245 = vdwg.mxu0
    %v246 = vmax.f32 %v241, 0.0
    %v247 = vpack.c.bf16 %v246, %v246
    %v248 = vld [vmem:[#allocation2] sm:$0xf]
    %v249 = vld [vmem:[#allocation2 + $0x4] sm:$0xf]
    %v250 = vld [vmem:[#allocation2 + $0x8] sm:$0xf]
    %v251 = vld [vmem:[#allocation2 + $0xc] sm:$0xf]
    %v252 = vld [vmem:[#allocation2 + $0x10] sm:$0xf]
    %v253 = vld [vmem:[#allocation2 + $0x14] sm:$0xf]
    %v254 = vld [vmem:[#allocation2 + $0x18] sm:$0xf]
    %v255 = vld [vmem:[#allocation2 + $0x1c] sm:$0xf]
    %v256 = vld [vmem:[#allocation2 + $0x20] sm:$0xf]
    %v257 = vld [vmem:[#allocation2 + $0x24] sm:$0xf]
    %v258 = vld [vmem:[#allocation2 + $0x28] sm:$0xf]
    %v259 = vld [vmem:[#allocation2 + $0x2c] sm:$0xf]
    %v260 = vld [vmem:[#allocation2 + $0x30] sm:$0xf]
    %v261 = vld [vmem:[#allocation2 + $0x34] sm:$0xf]
    %v262 = vld [vmem:[#allocation2 + $0x38] sm:$0xf]
    %v263 = vld [vmem:[#allocation2 + $0x3c] sm:$0xf]
    %v264 = vlaneseq
    %v265 = vshrl.u32 %v264, 7
    %v266 = vsub.s32 1, %v265
    %v267 = vrot.slane %v65, %v266
    %v284 = vunpack.c.l.b16 %v248
    %v285 = vunpack.c.l.b16 %v249
    %v286 = vunpack.c.l.b16 %v250
    %v287 = vunpack.c.l.b16 %v251
    %v288 = vunpack.c.l.b16 %v252
    %v289 = vunpack.c.l.b16 %v253
    %v290 = vunpack.c.l.b16 %v254
    %v291 = vunpack.c.l.b16 %v255
    %v292 = vunpack.c.l.b16 %v256
    %v293 = vunpack.c.l.b16 %v257
    %v294 = vunpack.c.l.b16 %v258
    %v295 = vunpack.c.l.b16 %v259
    %v296 = vunpack.c.l.b16 %v260
    %v297 = vunpack.c.l.b16 %v261
    %v298 = vunpack.c.l.b16 %v262
    %v299 = vunpack.c.l.b16 %v263
    %v300 = vpack.c.b16 %v285, %v284
    %v301 = vpack.c.b16 %v287, %v286
    %v302 = vpack.c.b16 %v289, %v288
    %v303 = vpack.c.b16 %v291, %v290
    %v304 = vpack.c.b16 %v293, %v292
    %v305 = vpack.c.b16 %v295, %v294
    %v306 = vpack.c.b16 %v297, %v296
    %v307 = vpack.c.b16 %v299, %v298
    %316 = vmatprep.subr.bf16.mxu0 0
    %317 = vmatpush1.bf16.msra.mxu0 %v300
    %318 = vmatprep.subr.bf16.mxu0 0
    %319 = vmatpush1.bf16.msra.mxu0 %v301
    %320 = vmatprep.subr.bf16.mxu0 0
    %321 = vmatpush1.bf16.msra.mxu0 %v302
    %322 = vmatprep.subr.bf16.mxu0 0
    %323 = vmatpush1.bf16.msra.mxu0 %v303
    %324 = vmatprep.subr.bf16.mxu0 0
    %325 = vmatpush1.bf16.msra.mxu0 %v304
    %326 = vmatprep.subr.bf16.mxu0 0
    %327 = vmatpush1.bf16.msra.mxu0 %v305
    %328 = vmatprep.subr.bf16.mxu0 0
    %329 = vmatpush1.bf16.msra.mxu0 %v306
    %330 = vmatprep.subr.bf16.mxu0 0
    %331 = vmatpush1.bf16.msra.mxu0 %v307
    %332 = vmatprep.subr.bf16.mxu0 0
    %333 = vmatpush1.bf16.msra.mxu0 0
    %334 = vmatprep.subr.bf16.mxu0 0
    %335 = vmatpush1.bf16.msra.mxu0 0
    %336 = vmatprep.subr.bf16.mxu0 0
    %337 = vmatpush1.bf16.msra.mxu0 0
    %338 = vmatprep.subr.bf16.mxu0 0
    %339 = vmatpush1.bf16.msra.mxu0 0
    %340 = vmatprep.subr.bf16.mxu0 0
    %341 = vmatpush1.bf16.msra.mxu0 0
    %342 = vmatprep.subr.bf16.mxu0 0
    %343 = vmatpush1.bf16.msra.mxu0 0
    %344 = vmatprep.subr.bf16.mxu0 0
    %345 = vmatpush1.bf16.msra.mxu0 0
    %346 = vmatprep.subr.bf16.mxu0 0
    %347 = vmatpush1.bf16.msra.mxu0 0
    %348 = vmatprep.mubr.bf16.mxu0 0
    %349 = vmatmul.mubr.bf16.gmra.mrb[0].mxu0 %v247
    %v350 = vpop.f32.mrb[0].mxu0
    %v351 = vadd.f32 %v267, %v350
    %v352 = vpop.f32.mrb[0].mxu0
    %v353 = vpop.f32.mrb[0].mxu0
    %v354 = vpop.f32.mrb[0].mxu0
    %355 = vdwg.mxu0
    %v356 = vmax.f32 %v351, 0.0
    %v357 = vpack.c.bf16 %v356, %v356
    %v358 = vld [vmem:[#allocation4] sm:$0xf]
    %v359 = vld [vmem:[#allocation4 + $0x4] sm:$0xf]
    %v360 = vld [vmem:[#allocation4 + $0x8] sm:$0xf]
    %v361 = vld [vmem:[#allocation4 + $0xc] sm:$0xf]
    %v362 = vld [vmem:[#allocation4 + $0x10] sm:$0xf]
    %v363 = vld [vmem:[#allocation4 + $0x14] sm:$0xf]
    %v364 = vld [vmem:[#allocation4 + $0x18] sm:$0xf]
    %v365 = vld [vmem:[#allocation4 + $0x1c] sm:$0xf]
    %v366 = vld [vmem:[#allocation4 + $0x20] sm:$0xf]
    %v367 = vld [vmem:[#allocation4 + $0x24] sm:$0xf]
    %v368 = vld [vmem:[#allocation4 + $0x28] sm:$0xf]
    %v369 = vld [vmem:[#allocation4 + $0x2c] sm:$0xf]
    %v370 = vld [vmem:[#allocation4 + $0x30] sm:$0xf]
    %v371 = vld [vmem:[#allocation4 + $0x34] sm:$0xf]
    %v372 = vld [vmem:[#allocation4 + $0x38] sm:$0xf]
    %v373 = vld [vmem:[#allocation4 + $0x3c] sm:$0xf]
    %v374 = vlaneseq
    %v375 = vshrl.u32 %v374, 7
    %v376 = vsub.s32 2, %v375
    %v377 = vrot.slane %v65, %v376
    %v394 = vunpack.c.l.b16 %v358
    %v395 = vunpack.c.l.b16 %v359
    %v396 = vunpack.c.l.b16 %v360
    %v397 = vunpack.c.l.b16 %v361
    %v398 = vunpack.c.l.b16 %v362
    %v399 = vunpack.c.l.b16 %v363
    %v400 = vunpack.c.l.b16 %v364
    %v401 = vunpack.c.l.b16 %v365
    %v402 = vunpack.c.l.b16 %v366
    %v403 = vunpack.c.l.b16 %v367
    %v404 = vunpack.c.l.b16 %v368
    %v405 = vunpack.c.l.b16 %v369
    %v406 = vunpack.c.l.b16 %v370
    %v407 = vunpack.c.l.b16 %v371
    %v408 = vunpack.c.l.b16 %v372
    %v409 = vunpack.c.l.b16 %v373
    %v410 = vpack.c.b16 %v395, %v394
    %v411 = vpack.c.b16 %v397, %v396
    %v412 = vpack.c.b16 %v399, %v398
    %v413 = vpack.c.b16 %v401, %v400
    %v414 = vpack.c.b16 %v403, %v402
    %v415 = vpack.c.b16 %v405, %v404
    %v416 = vpack.c.b16 %v407, %v406
    %v417 = vpack.c.b16 %v409, %v408
    %426 = vmatprep.subr.bf16.mxu0 0
    %427 = vmatpush1.bf16.msra.mxu0 %v410
    %428 = vmatprep.subr.bf16.mxu0 0
    %429 = vmatpush1.bf16.msra.mxu0 %v411
    %430 = vmatprep.subr.bf16.mxu0 0
    %431 = vmatpush1.bf16.msra.mxu0 %v412
    %432 = vmatprep.subr.bf16.mxu0 0
    %433 = vmatpush1.bf16.msra.mxu0 %v413
    %434 = vmatprep.subr.bf16.mxu0 0
    %435 = vmatpush1.bf16.msra.mxu0 %v414
    %436 = vmatprep.subr.bf16.mxu0 0
    %437 = vmatpush1.bf16.msra.mxu0 %v415
    %438 = vmatprep.subr.bf16.mxu0 0
    %439 = vmatpush1.bf16.msra.mxu0 %v416
    %440 = vmatprep.subr.bf16.mxu0 0
    %441 = vmatpush1.bf16.msra.mxu0 %v417
    %442 = vmatprep.subr.bf16.mxu0 0
    %443 = vmatpush1.bf16.msra.mxu0 0
    %444 = vmatprep.subr.bf16.mxu0 0
    %445 = vmatpush1.bf16.msra.mxu0 0
    %446 = vmatprep.subr.bf16.mxu0 0
    %447 = vmatpush1.bf16.msra.mxu0 0
    %448 = vmatprep.subr.bf16.mxu0 0
    %449 = vmatpush1.bf16.msra.mxu0 0
    %450 = vmatprep.subr.bf16.mxu0 0
    %451 = vmatpush1.bf16.msra.mxu0 0
    %452 = vmatprep.subr.bf16.mxu0 0
    %453 = vmatpush1.bf16.msra.mxu0 0
    %454 = vmatprep.subr.bf16.mxu0 0
    %455 = vmatpush1.bf16.msra.mxu0 0
    %456 = vmatprep.subr.bf16.mxu0 0
    %457 = vmatpush1.bf16.msra.mxu0 0
    %458 = vmatprep.mubr.bf16.mxu0 0
    %459 = vmatmul.mubr.bf16.gmra.mrb[0].mxu0 %v357
    %v460 = vpop.f32.mrb[0].mxu0
    %v461 = vadd.f32 %v377, %v460
    %v462 = vpop.f32.mrb[0].mxu0
    %v463 = vpop.f32.mrb[0].mxu0
    %v464 = vpop.f32.mrb[0].mxu0
    %465 = vdwg.mxu0
    %v466 = vmax.f32 %v461, 0.0
    %v467 = vpack.c.bf16 %v466, %v466
    %v468 = vld [vmem:[#allocation6] sm:$0xf]
    %v469 = vld [vmem:[#allocation6 + $0x4] sm:$0xf]
    %v470 = vld [vmem:[#allocation6 + $0x8] sm:$0xf]
    %v471 = vld [vmem:[#allocation6 + $0xc] sm:$0xf]
    %v472 = vld [vmem:[#allocation6 + $0x10] sm:$0xf]
    %v473 = vld [vmem:[#allocation6 + $0x14] sm:$0xf]
    %v474 = vld [vmem:[#allocation6 + $0x18] sm:$0xf]
    %v475 = vld [vmem:[#allocation6 + $0x1c] sm:$0xf]
    %v476 = vld [vmem:[#allocation6 + $0x20] sm:$0xf]
    %v477 = vld [vmem:[#allocation6 + $0x24] sm:$0xf]
    %v478 = vld [vmem:[#allocation6 + $0x28] sm:$0xf]
    %v479 = vld [vmem:[#allocation6 + $0x2c] sm:$0xf]
    %v480 = vld [vmem:[#allocation6 + $0x30] sm:$0xf]
    %v481 = vld [vmem:[#allocation6 + $0x34] sm:$0xf]
    %v482 = vld [vmem:[#allocation6 + $0x38] sm:$0xf]
    %v483 = vld [vmem:[#allocation6 + $0x3c] sm:$0xf]
    %v484 = vlaneseq
    %v485 = vshrl.u32 %v484, 7
    %v486 = vsub.s32 3, %v485
    %v487 = vrot.slane %v65, %v486
    %v504 = vunpack.c.l.b16 %v468
    %v505 = vunpack.c.l.b16 %v469
    %v506 = vunpack.c.l.b16 %v470
    %v507 = vunpack.c.l.b16 %v471
    %v508 = vunpack.c.l.b16 %v472
    %v509 = vunpack.c.l.b16 %v473
    %v510 = vunpack.c.l.b16 %v474
    %v511 = vunpack.c.l.b16 %v475
    %v512 = vunpack.c.l.b16 %v476
    %v513 = vunpack.c.l.b16 %v477
    %v514 = vunpack.c.l.b16 %v478
    %v515 = vunpack.c.l.b16 %v479
    %v516 = vunpack.c.l.b16 %v480
    %v517 = vunpack.c.l.b16 %v481
    %v518 = vunpack.c.l.b16 %v482
    %v519 = vunpack.c.l.b16 %v483
    %v520 = vpack.c.b16 %v505, %v504
    %v521 = vpack.c.b16 %v507, %v506
    %v522 = vpack.c.b16 %v509, %v508
    %v523 = vpack.c.b16 %v511, %v510
    %v524 = vpack.c.b16 %v513, %v512
    %v525 = vpack.c.b16 %v515, %v514
    %v526 = vpack.c.b16 %v517, %v516
    %v527 = vpack.c.b16 %v519, %v518
    %536 = vmatprep.subr.bf16.mxu0 0
    %537 = vmatpush1.bf16.msra.mxu0 %v520
    %538 = vmatprep.subr.bf16.mxu0 0
    %539 = vmatpush1.bf16.msra.mxu0 %v521
    %540 = vmatprep.subr.bf16.mxu0 0
    %541 = vmatpush1.bf16.msra.mxu0 %v522
    %542 = vmatprep.subr.bf16.mxu0 0
    %543 = vmatpush1.bf16.msra.mxu0 %v523
    %544 = vmatprep.subr.bf16.mxu0 0
    %545 = vmatpush1.bf16.msra.mxu0 %v524
    %546 = vmatprep.subr.bf16.mxu0 0
    %547 = vmatpush1.bf16.msra.mxu0 %v525
    %548 = vmatprep.subr.bf16.mxu0 0
    %549 = vmatpush1.bf16.msra.mxu0 %v526
    %550 = vmatprep.subr.bf16.mxu0 0
    %551 = vmatpush1.bf16.msra.mxu0 %v527
    %552 = vmatprep.subr.bf16.mxu0 0
    %553 = vmatpush1.bf16.msra.mxu0 0
    %554 = vmatprep.subr.bf16.mxu0 0
    %555 = vmatpush1.bf16.msra.mxu0 0
    %556 = vmatprep.subr.bf16.mxu0 0
    %557 = vmatpush1.bf16.msra.mxu0 0
    %558 = vmatprep.subr.bf16.mxu0 0
    %559 = vmatpush1.bf16.msra.mxu0 0
    %560 = vmatprep.subr.bf16.mxu0 0
    %561 = vmatpush1.bf16.msra.mxu0 0
    %562 = vmatprep.subr.bf16.mxu0 0
    %563 = vmatpush1.bf16.msra.mxu0 0
    %564 = vmatprep.subr.bf16.mxu0 0
    %565 = vmatpush1.bf16.msra.mxu0 0
    %566 = vmatprep.subr.bf16.mxu0 0
    %567 = vmatpush1.bf16.msra.mxu0 0
    %568 = vmatprep.mubr.bf16.mxu0 0
    %569 = vmatmul.mubr.bf16.gmra.mrb[0].mxu0 %v467
    %v570 = vpop.f32.mrb[0].mxu0
    %v571 = vadd.f32 %v487, %v570
    %v572 = vpop.f32.mrb[0].mxu0
    %v573 = vpop.f32.mrb[0].mxu0
    %v574 = vpop.f32.mrb[0].mxu0
    %575 = vdwg.mxu0
    %v576 = vxor.u32 %v571, 2147483648
    %v577 = vmul.f32 %v576, 1.442695
    %v578 = vpow.pop %v577
    %v579 = vadd.f32 %v578, 1.0
    %v580 = vrcp.pop %v579
    %v581 = vmul.f32 1.0, %v580
    %v582 = vmul.f32 %v356, %v581
    %v583 = vadd.f32 %v582, %v356
    %584 = vst [vmem:[%s6] sm:$0xff] %v583
    // Predicated region
    $region38: #{compact_layer.1} parent=1 // pred_check
      _
    $region39: #{compact_layer.1} parent=1 // pred_check_branch
      %586 = sbr.rel (0) target = $region41
    $region40: #{compact_layer.1} parent=1 // pred_region
      _
    $region41: #{compact_layer.1} parent=1 // pred_fallthru
      _
    // Predicated region
    $region42: #{compact_layer.1} parent=1 // pred_check
      _
    $region43: #{compact_layer.1} parent=1 // pred_check_branch
      %588 = sbr.rel (0) target = $region45
    $region44: #{compact_layer.1} parent=1 // pred_region
      _
    $region45: #{compact_layer.1} parent=1 // pred_fallthru
      _
    %589 = vsyncpa [#allocation3], 1
    %590 = vsyncpa [#allocation5], 1

</llo_original>
